<compile_context>
chip_gen: v7x
topology: tpu7x:2x2x1
jax: 0.10.0
libtpu: 0.0.40
codegen_flags: <defaults>
</compile_context>

<pallas_src>
import functools

import jax
import jax.numpy as jnp
from jax import lax
from jax.experimental import pallas as pl
from jax.experimental.pallas import tpu as pltpu


def _rmsnorm_kernel(x_ref, w_ref, o_ref, *, eps, hidden):
    # x_ref: (ROW_TILE, H_padded) in the input dtype; w_ref: (1, H_padded) f32.
    x_f32 = x_ref[...].astype(jnp.float32)
    # Sum of squares over the lane axis; divide by the TRUE hidden size so
    # zero-padded lanes (hidden % 128 != 0) do not perturb the mean.
    ssq = jnp.sum(x_f32 * x_f32, axis=-1, keepdims=True)
    inv = lax.rsqrt(ssq * (1.0 / hidden) + eps)          # EUP rsqrt, f32
    # NOTE(perf): if a v7x bundle dump ever shows the VALU slot saturating for
    # bf16/fp8 inputs, this reduction can be offloaded to the idle MXU via
    # jnp.dot(x_sq, ones((H, 1), f32)); HBM remains the limiter on v5e/v6e.
    o_ref[...] = (w_ref[...] * (x_f32 * inv)).astype(o_ref.dtype)


def _sublane_multiple(dtype) -> int:
    # Rows per vreg: 8 for 32-bit, 16 for bf16/f16, 32 for int8/fp8.
    itemsize = jnp.dtype(dtype).itemsize
    return max(8, 32 // max(1, itemsize))


def _round_up(x: int, m: int) -> int:
    return ((x + m - 1) // m) * m


def _generation_params():
    """Returns (block_budget_bytes, vmem_ceiling_bytes) per TPU generation."""
    try:
        vmem_cap = int(getattr(pltpu.get_tpu_info(), "vmem_capacity_bytes",
                               64 << 20))
    except Exception:
        vmem_cap = 64 << 20              # conservative: assume v7x-sized VMEM
    if vmem_cap <= (64 << 20):
        # v7x: 64 MiB per TensorCore is the ENTIRE VMEM.  Leave headroom for
        # compiler-internal scratch and DMA machinery -> scoped cap 48 MiB.
        return 8 << 20, 48 << 20
    # v5e / v6e: 128 MiB physical VMEM -> bigger blocks, higher ceiling.
    return 16 << 20, 96 << 20


def rmsnorm(hidden_states: jax.Array, weight: jax.Array, eps: float = 1e-5,
            row_tile: int | None = None) -> jax.Array:
    """RMSNorm over the last axis of `hidden_states` with per-feature `weight`."""
    orig_shape = hidden_states.shape
    hidden = orig_shape[-1]
    dtype = hidden_states.dtype
    itemsize = jnp.dtype(dtype).itemsize
    sub = _sublane_multiple(dtype)

    x2d = hidden_states.reshape(-1, hidden)
    rows = x2d.shape[0]

    # Lane-dense layout: pad hidden to a multiple of 128 (zeros) so output
    # stores are full-lane `vst`, not masked partial stores.  The kernel uses
    # the true `hidden` for the mean, so zero padding is semantically inert.
    hidden_p = _round_up(hidden, 128)
    w_f32 = weight.astype(jnp.float32).reshape(-1)
    if hidden_p != hidden:
        x2d = jnp.pad(x2d, ((0, 0), (0, hidden_p - hidden)))
        w_f32 = jnp.pad(w_f32, (0, hidden_p - hidden))
    w2d = w_f32.reshape(1, hidden_p)

    block_budget, vmem_ceiling = _generation_params()
    margin = 2 << 20

    # Per-row VMEM footprint: double-buffered input + output blocks plus the
    # f32 intermediates.  For f32 inputs the f32 view is the input block
    # itself (~1 extra f32 copy); narrower dtypes need ~2.
    f32_copies = 1 if itemsize == 4 else 2
    per_row_vmem = hidden_p * (4 * itemsize + f32_copies * 4)

    if row_tile is None:
        # Size the block from the f32 working-set budget (no fixed row cap).
        row_tile = max(sub, block_budget // (hidden_p * 4))
    # Never exceed what fits under the scoped-VMEM ceiling.
    # TODO(synk): for extremely large hidden (where even one sublane-group of
    # rows no longer fits VMEM), add an H-chunked two-pass variant with a
    # per-row sum-of-squares accumulator over a second "arbitrary" grid axis.
    max_rows_vmem = max(sub, (vmem_ceiling - margin) // per_row_vmem)
    row_tile = min(row_tile, max_rows_vmem)
    # Keep >= ~4 grid steps when there is enough work, so the parallel axis
    # shards across TensorCores (2 per chip on v7x) and the pipeline overlaps.
    if rows > 4 * sub:
        row_tile = min(row_tile, _round_up(pl.cdiv(rows, 4), sub))
    row_tile = max(sub, _round_up(row_tile, sub))
    row_tile = min(row_tile, _round_up(rows, sub))

    vmem_bytes = row_tile * per_row_vmem + 2 * hidden_p * 4 + margin
    vmem_bytes = int(min(max(vmem_bytes, 32 << 20), vmem_ceiling))

    grid = (pl.cdiv(rows, row_tile),)

    out = pl.pallas_call(
        functools.partial(_rmsnorm_kernel, eps=eps, hidden=hidden),
        out_shape=jax.ShapeDtypeStruct((rows, hidden_p), dtype),
        grid_spec=pltpu.PrefetchScalarGridSpec(
            num_scalar_prefetch=0,
            grid=grid,
            in_specs=[
                pl.BlockSpec((row_tile, hidden_p), lambda i: (i, 0)),
                pl.BlockSpec((1, hidden_p), lambda i: (0, 0)),
            ],
            out_specs=pl.BlockSpec((row_tile, hidden_p), lambda i: (i, 0)),
        ),
        compiler_params=pltpu.CompilerParams(
            dimension_semantics=("parallel",),
            vmem_limit_bytes=vmem_bytes),
    )(x2d, w2d)

    if hidden_p != hidden:
        out = out[:, :hidden]
    return out.reshape(orig_shape)


def rmsnorm_ref(hidden_states, weight, eps=1e-5):
    x_f32 = hidden_states.astype(jnp.float32)
    variance = jnp.mean(x_f32 * x_f32, axis=-1, keepdims=True)
    normed = x_f32 * lax.rsqrt(variance + eps)
    return (weight.astype(jnp.float32) * normed).astype(hidden_states.dtype)


if __name__ == "__main__":
    key = jax.random.PRNGKey(0)
    kx, kw, k2, k3, k4 = jax.random.split(key, 5)

    batch, seq, hidden = 2, 8, 128
    weight = 1.0 + 0.01 * jax.random.normal(kw, (hidden,), dtype=jnp.float32)

    # 1) Basic f32 case.
    x = jax.random.normal(kx, (batch, seq, hidden), dtype=jnp.float32)
    out = jax.block_until_ready(rmsnorm(x, weight, eps=1e-5))
    ref = rmsnorm_ref(x, weight, eps=1e-5)
    assert out.shape == x.shape and out.dtype == x.dtype
    assert jnp.allclose(out, ref, atol=1e-5, rtol=1e-5), "f32 mismatch"

    # 2) Partial trailing row block (rows not a multiple of the sublane tile).
    x_odd = jax.random.normal(k2, (2, 7, hidden), dtype=jnp.float32)
    out_odd = jax.block_until_ready(rmsnorm(x_odd, weight, eps=1e-5))
    assert jnp.allclose(out_odd, rmsnorm_ref(x_odd, weight, eps=1e-5),
                        atol=1e-5, rtol=1e-5), "partial-block mismatch"

    # 3) hidden not a multiple of 128 -> lane-padding path.
    h_pad = 100
    w_pad = 1.0 + 0.01 * jax.random.normal(kw, (h_pad,), dtype=jnp.float32)
    x_pad = jax.random.normal(k3, (2, 8, h_pad), dtype=jnp.float32)
    out_pad = jax.block_until_ready(rmsnorm(x_pad, w_pad, eps=1e-5))
    assert out_pad.shape == x_pad.shape
    assert jnp.allclose(out_pad, rmsnorm_ref(x_pad, w_pad, eps=1e-5),
                        atol=1e-5, rtol=1e-5), "lane-padded mismatch"

    # 4) bf16 input + multi-step grid (exercises the megacore-friendly tiling).
    x_bf = jax.random.normal(k4, (4, 64, hidden), dtype=jnp.bfloat16)
    out_bf = jax.block_until_ready(rmsnorm(x_bf, weight, eps=1e-5))
    ref_bf = rmsnorm_ref(x_bf, weight, eps=1e-5)
    assert out_bf.dtype == jnp.bfloat16
    assert jnp.allclose(out_bf.astype(jnp.float32), ref_bf.astype(jnp.float32),
                        atol=2e-2, rtol=2e-2), "bf16 mismatch"

    print("KERNEL_OK")
</pallas_src>

<mosaic_0001>
module attributes {stable_mosaic.version = 11 : i64} {
  func.func @_rmsnorm_kernel(%arg0: i32, %arg1: memref<16x128xf32, #tpu.memory_space<vmem>>, %arg2: memref<1x128xf32, #tpu.memory_space<vmem>>, %arg3: memref<16x128xf32, #tpu.memory_space<vmem>>) attributes {dimension_semantics = [#tpu.dimension_semantics<parallel>], iteration_bounds = array<i64: 1>, scalar_prefetch = 0 : i64, scratch_operands = 0 : i64, tpu.core_type = #tpu.core_type<tc>, window_params = [{transform_indices = @transform_0, window_bounds = array<i64: 16, 128>}, {pipeline_mode = #tpu.pipeline_mode<synchronous>, transform_indices = @transform_1, window_bounds = array<i64: 1, 128>}, {transform_indices = @transform_2, window_bounds = array<i64: 16, 128>}]} {
    %c0 = arith.constant 0 : index
    %c0_0 = arith.constant 0 : index
    %0 = vector.load %arg1[%c0, %c0_0] : memref<16x128xf32, #tpu.memory_space<vmem>>, vector<16x128xf32>
    %1 = arith.mulf %0, %0 : vector<16x128xf32>
    %cst = arith.constant dense<0.000000e+00> : vector<16xf32>
    %2 = vector.multi_reduction <add>, %1, %cst [1] : vector<16x128xf32> to vector<16xf32>
    %3 = vector.shape_cast %2 : vector<16xf32> to vector<16x1xf32>
    %cst_1 = arith.constant 7.812500e-03 : f32
    %4 = vector.broadcast %cst_1 : f32 to vector<16x1xf32>
    %5 = arith.mulf %3, %4 : vector<16x1xf32>
    %cst_2 = arith.constant 9.99999974E-6 : f32
    %6 = vector.broadcast %cst_2 : f32 to vector<16x1xf32>
    %7 = arith.addf %5, %6 : vector<16x1xf32>
    %8 = math.rsqrt %7 : vector<16x1xf32>
    %c0_3 = arith.constant 0 : index
    %c0_4 = arith.constant 0 : index
    %9 = vector.load %arg2[%c0_3, %c0_4] : memref<1x128xf32, #tpu.memory_space<vmem>>, vector<1x128xf32>
    %10 = vector.broadcast %8 : vector<16x1xf32> to vector<16x128xf32>
    %11 = arith.mulf %0, %10 : vector<16x128xf32>
    %12 = vector.broadcast %9 : vector<1x128xf32> to vector<16x128xf32>
    %13 = arith.mulf %12, %11 : vector<16x128xf32>
    %c0_5 = arith.constant 0 : index
    %c0_6 = arith.constant 0 : index
    %14 = vector.load %arg3[%c0_5, %c0_6] : memref<16x128xf32, #tpu.memory_space<vmem>>, vector<16x128xf32>
    tpu.vector_store %arg3[%c0_5, %c0_6], %13 {strides = array<i32>} : memref<16x128xf32, #tpu.memory_space<vmem>>, vector<16x128xf32>,
    return
  }
  func.func @transform_0(%arg0: i32) -> (i32, i32) {
    %c0_i32 = arith.constant 0 : i32
    %c0_i32_0 = arith.constant 0 : i32
    return %arg0, %c0_i32 : i32, i32
  }
  func.func @transform_1(%arg0: i32) -> (i32, i32) {
    %c0_i32 = arith.constant 0 : i32
    %c0_i32_0 = arith.constant 0 : i32
    %c0_i32_1 = arith.constant 0 : i32
    return %c0_i32, %c0_i32_0 : i32, i32
  }
  func.func @transform_2(%arg0: i32) -> (i32, i32) {
    %c0_i32 = arith.constant 0 : i32
    %c0_i32_0 = arith.constant 0 : i32
    return %arg0, %c0_i32 : i32, i32
  }
}

</mosaic_0001>

<llo_original>
// kernel: tpu_custom_call.1
$region0: #{tpu_custom_call.1}
  #allocation0 [shape = 'u32[]', space=smem, size = 0x4, offset = 0x4, fixed_abs, tag = 'smem constant byte address 0x4 - core index']
  #allocation1 [shape = 'u32[144,128]{1,0:T(1,128)}', space=vmem, size = 0x12000, scoped, tag = 'internal scratch']
  %s0 = inlined_call_operand.hbm [shape: f32[16,128], index: 0, kind: input, shape index: {}]
  %s1 = inlined_call_operand.vmem [shape: f32[1,128], index: 1, kind: input, shape index: {}]
  %s2 = inlined_call_operand.hbm [shape: f32[16,128], index: 2, kind: output, shape index: {}]
  %s3 = sld [smem:[#allocation0]]
  $region22: #{tpu_custom_call.1} parent=0
    _
  %s5 = ssub.s32 1, %s3
  %s6 = scalar_select 0, %s5, %s3
  $region1: #{tpu_custom_call.1} parent=0
    #allocation2 [shape = 'u8[8192]{0}', space=vmem, size = 0x2000, scoped, tag = 'input window, operand 0, single buffered']
    #allocation3 [shape = 's32[1]{0}', space=sflag, size = 0x4, scoped, tag = 'scoped memory for tpu_custom_call.1']
    #allocation4 [shape = 's32[1]{0}', space=sflag, size = 0x4, scoped, tag = 'scoped memory for tpu_custom_call.1']
    #allocation5 [shape = 'u8[8192]{0}', space=vmem, size = 0x2000, scoped, tag = 'output window, operand 0, single buffered']
    %7 = vsyncpa [#allocation3], 0
    %8 = vsyncpa [#allocation4], 0
    // Predicated region
    $region2: #{tpu_custom_call.1} parent=1 // pred_check
      _
    $region3: #{tpu_custom_call.1} parent=1 // pred_check_branch
      %10 = sbr.rel (0) target = $region5
    $region4: #{tpu_custom_call.1} parent=1 // pred_region
      %s12 = ssub.s32 256, 256
      %13 = vsyncadd [#allocation3], %s12
      %s14 = sshll.u32 [#allocation2], 4
      %s15 = int_to_ptr.vmem [resolvable:$true] %s14
      %20 = dma.hbm_to_vmem [thread:$0]  %s0, 256, %s15, [#allocation3], 128, 128, 8
    $region5: #{tpu_custom_call.1} parent=1 // pred_fallthru
      _
    // Predicated region
    $region6: #{tpu_custom_call.1} parent=1 // pred_check
      _
    $region7: #{tpu_custom_call.1} parent=1 // pred_check_branch
      %22 = sbr.rel (0) target = $region9
    $region8: #{tpu_custom_call.1} parent=1 // pred_region
      _
    $region9: #{tpu_custom_call.1} parent=1 // pred_fallthru
      _
    // Predicated region
    $region10: #{tpu_custom_call.1} parent=1 // pred_check
      _
    $region11: #{tpu_custom_call.1} parent=1 // pred_check_branch
      %24 = sbr.rel (0) target = $region13
    $region12: #{tpu_custom_call.1} parent=1 // pred_region
      %25 = dma.done [#allocation3], 256
    $region13: #{tpu_custom_call.1} parent=1 // pred_fallthru
      _
    %v26 = vld [vmem:[#allocation2] sm:$0xff]
    %v27 = vld [vmem:[#allocation2 + $0x8] sm:$0xff]
    %v28 = vmul.f32 %v26, %v26
    %v29 = vmul.f32 %v27, %v27
    %30 = vadd.xlane.f32.xlu0 %v28
    %v31 = vpop.xlane.xlu0 %30
    %32 = vadd.xlane.f32.xlu0 %v29
    %v33 = vpop.xlane.xlu0 %32
    %v34 = vmul.f32 %v31, 0.0078125
    %v35 = vmul.f32 %v33, 0.0078125
    %v36 = vadd.f32 %v34, 1e-05
    %v37 = vadd.f32 %v35, 1e-05
    %v38 = vrsqrt.pop %v36
    %v39 = vrsqrt.pop %v37
    %v40 = vld [vmem:[%s1] sm:$0x1]
    %v41 = vmul.f32 %v26, %v38
    %v42 = vmul.f32 %v27, %v39
    %v44 = vlaneseq
    %v45 = vshrl.u32 %v44, 7
    %v46 = vsub.s32 0, %v45
    %v47 = vrot.slane %v40, %v46
    %v49 = vmul.f32 %v47, %v41
    %v50 = vmul.f32 %v47, %v42
    %51 = vst [vmem:[#allocation5] sm:$0xff] %v49
    %52 = vst [vmem:[#allocation5 + $0x8] sm:$0xff] %v50
    // Predicated region
    $region14: #{tpu_custom_call.1} parent=1 // pred_check
      _
    $region15: #{tpu_custom_call.1} parent=1 // pred_check_branch
      %54 = sbr.rel (0) target = $region17
    $region16: #{tpu_custom_call.1} parent=1 // pred_region
      %s56 = ssub.s32 256, 256
      %57 = vsyncadd [#allocation4], %s56
      %s58 = sshll.u32 [#allocation5], 4
      %s59 = int_to_ptr.vmem [resolvable:$true] %s58
      %64 = dma.vmem_to_hbm [thread:$0]  %s59, 256, %s2, [#allocation4], 128, 128, 8
    $region17: #{tpu_custom_call.1} parent=1 // pred_fallthru
      _
    // Predicated region
    $region18: #{tpu_custom_call.1} parent=1 // pred_check
      _
    $region19: #{tpu_custom_call.1} parent=1 // pred_check_branch
      %66 = sbr.rel (0) target = $region21
    $region20: #{tpu_custom_call.1} parent=1 // pred_region
      %67 = dma.done [#allocation4], 256
    $region21: #{tpu_custom_call.1} parent=1 // pred_fallthru
      _
    %68 = vsyncpa [#allocation3], 1
    %69 = vsyncpa [#allocation4], 1

</llo_original>
